<compile_context>
chip_gen: v7x
topology: tpu7x:2x2x1
jax: 0.10.0
libtpu: 0.0.40
codegen_flags: <defaults>
</compile_context>

<pallas_src>
import functools

import jax
import jax.numpy as jnp
import numpy as np
from jax.experimental import pallas as pl
from jax.experimental.pallas import tpu as pltpu

_LANE = 128
_SUB = 8


def _round_up(x, m):
    return ((x + m - 1) // m) * m


def _tandem_kernel(n_img, n_pad,
                   gamma_ref, feat_real_ref, feat_pred_ref, img_ref,
                   loss_ref, accu_ref,
                   sum_ref, sumsq_ref, bin_ref):
    """One grid step: accumulate partial reductions of one image tile; the
    last step also folds in the (resident) feature tensors and writes the two
    scalar outputs to SMEM.

    n_img  : true per-batch image element count (python int, baked).
    n_pad  : per-batch padded element count (pad value 1.5 -> d == 1.0 exactly).
    """
    k = pl.program_id(0)
    last = pl.num_programs(0) - 1

    @pl.when(k == 0)
    def _init():
        sum_ref[...] = jnp.zeros_like(sum_ref)
        sumsq_ref[...] = jnp.zeros_like(sumsq_ref)
        bin_ref[...] = jnp.zeros_like(bin_ref)

    # ---- hot loop: elementwise + per-batch partial reductions --------------
    # img block is (B, tile_rows, 128): full (8,128) vregs regardless of B.
    d = img_ref[...].astype(jnp.float32) - 0.5
    d2 = d * d
    den = d2 + 1e-5
    r0 = pl.reciprocal(den, approx=True)          # EUP slot (~free here)
    binary = r0 * (2.0 - den * r0)                # one NR step on the VPU

    def _psum(x):  # (B, tr, 128) -> (B, 1, 1): lane reduce then sublane reduce
        return jnp.sum(jnp.sum(x, axis=2, keepdims=True), axis=1, keepdims=True)

    sum_ref[...] += _psum(d)
    sumsq_ref[...] += _psum(d2)
    bin_ref[...] += _psum(binary)

    # ---- finalize -----------------------------------------------------------
    @pl.when(k == last)
    def _finalize():
        batch = sum_ref.shape[0]
        n_feat = feat_real_ref.shape[0] * feat_real_ref.shape[1]

        # compile-time reciprocals (no scalar divides in the epilogue)
        inv_n = 1.0 / n_img
        inv_nm1 = 1.0 / (n_img - 1)
        inv_bn = 1.0 / (batch * n_img)
        inv_b = 1.0 / batch
        inv_f = 1.0 / n_feat

        # Exact corrections for the 1.5-valued padding (d == 1.0 there).
        pad_f = float(n_pad)
        s = sum_ref[...] - pad_f                      # (B,1,1)
        ss = sumsq_ref[...] - pad_f                   # (B,1,1)
        bin_total = jnp.sum(bin_ref[...]) - batch * pad_f * (1.0 / (1.0 + 1e-5))

        # curve loss (feature MSE) — the feature block is resident (constant
        # index_map -> fetched once, not once per grid step).
        df = (feat_pred_ref[...].astype(jnp.float32)
              - feat_real_ref[...].astype(jnp.float32))
        curve_loss = jnp.sum(df * df) * inv_f

        image_binary = bin_total * inv_bn

        # Unbiased per-batch variance over non-batch dims; data was shifted by
        # 0.5 before accumulation (variance is shift-invariant), which keeps
        # the single-pass formula well conditioned for images in [0, 1].
        var_b = (ss - s * s * inv_n) * inv_nm1        # (B,1,1)
        image_entropy = jnp.sum(1.0 / (var_b + 1e-5)) * inv_b

        g = gamma_ref[0]                               # runtime SMEM scalar
        image_loss = 2.0 * image_binary + 0.01 * image_entropy  # image_mseloss == 0
        loss = (1.0 - g) * curve_loss + g * image_loss

        loss_ref[0, 0] = loss
        accu_ref[0, 0] = image_binary


def tandem_loss_l2(feat_real, feat_pred, imag_real, imag_pred, gamma=0.0,
                   *, tile_rows=None):
    """feat_*: (B, F...) ; imag_*: (B, C, H, W) NCHW.  Returns (loss, accu) f32."""
    del imag_real  # unused by the torch forward's sub-losses

    B = feat_real.shape[0]
    fr = feat_real.reshape(B, -1)          # keep original dtype (no upcast)
    fp = feat_pred.reshape(B, -1)
    ip = imag_pred.reshape(B, -1)
    M = ip.shape[1]
    if M < 2:
        raise ValueError("TandemLossL2 needs >= 2 non-batch image elements "
                         "(unbiased variance divides by N-1).")

    itemsize = jnp.dtype(ip.dtype).itemsize
    R = _round_up(M, _LANE) // _LANE       # rows of 128 lanes per batch

    if tile_rows is None:
        # ~4 MiB per pipeline buffer (x2 for double buffering) -> safe under
        # the scoped-VMEM defaults of v5e (16 MiB), v6e (32 MiB), v7x (32 MiB).
        budget = 4 * 1024 * 1024
        tr = max(_SUB, budget // (B * _LANE * itemsize))
    else:
        tr = max(_SUB, int(tile_rows))
    tr = _round_up(tr, _SUB)
    tr = min(tr, _round_up(R, _SUB))

    R_pad = _round_up(R, tr)
    M_pad = R_pad * _LANE
    n_pad = M_pad - M                      # per-batch padded element count
    if n_pad:
        # pad value 1.5 -> (x - 0.5) == 1.0 exactly in f32/bf16; its
        # contributions are removed with exact constants in the kernel.
        ip = jnp.pad(ip, ((0, 0), (0, n_pad)), constant_values=1.5)
    ip3 = ip.reshape(B, R_pad, _LANE)      # lane/sublane-dense view (no copy if aligned)

    num_tiles = R_pad // tr
    gamma_arr = jnp.asarray([gamma], dtype=jnp.float32)

    kernel = functools.partial(_tandem_kernel, M, n_pad)

    loss, accu = pl.pallas_call(
        kernel,
        grid=(num_tiles,),
        in_specs=[
            pl.BlockSpec(memory_space=pltpu.MemorySpace.SMEM),       # gamma
            pl.BlockSpec(fr.shape, lambda k: (0, 0)),                # feat real (resident)
            pl.BlockSpec(fp.shape, lambda k: (0, 0)),                # feat pred (resident)
            pl.BlockSpec((B, tr, _LANE), lambda k: (0, k, 0)),       # image tile (pipelined)
        ],
        out_specs=(
            pl.BlockSpec(memory_space=pltpu.MemorySpace.SMEM),       # loss scalar
            pl.BlockSpec(memory_space=pltpu.MemorySpace.SMEM),       # accu scalar
        ),
        out_shape=(
            jax.ShapeDtypeStruct((1, 1), jnp.float32),
            jax.ShapeDtypeStruct((1, 1), jnp.float32),
        ),
        scratch_shapes=[
            pltpu.VMEM((B, 1, 1), jnp.float32),   # per-batch sum of (x-0.5)
            pltpu.VMEM((B, 1, 1), jnp.float32),   # per-batch sum of (x-0.5)^2
            pltpu.VMEM((B, 1, 1), jnp.float32),   # per-batch sum of binary map
        ],
        compiler_params=pltpu.CompilerParams(
            dimension_semantics=("arbitrary",),
            vmem_limit_bytes=32 * 1024 * 1024,
        ),
    )(gamma_arr, fr, fp, ip3)

    return loss[0, 0], accu[0, 0]


def _reference(feat_real, feat_pred, imag_pred, gamma):
    """Pure-JAX f32 reference mirroring the PyTorch code (for verification)."""
    feat_real = feat_real.astype(jnp.float32)
    feat_pred = feat_pred.astype(jnp.float32)
    imag_pred = imag_pred.astype(jnp.float32)
    curve = jnp.mean((feat_pred - feat_real) ** 2)
    binary = jnp.mean(1.0 / ((imag_pred - 0.5) ** 2 + 1e-5))
    B = imag_pred.shape[0]
    flat = imag_pred.reshape(B, -1)
    var_b = jnp.var(flat, axis=1, ddof=1)   # torch .var default: unbiased
    entropy = jnp.mean(1.0 / (var_b + 1e-5))
    image_loss = 2.0 * binary + 0.01 * entropy
    loss = (1.0 - gamma) * curve + gamma * image_loss
    return loss, binary


def _check(feat_real, feat_pred, imag_real, imag_pred, gamma, **kw):
    loss, accu = tandem_loss_l2(feat_real, feat_pred, imag_real, imag_pred,
                                gamma=gamma, **kw)
    jax.block_until_ready((loss, accu))
    ref_loss, ref_accu = _reference(feat_real, feat_pred, imag_pred, gamma)
    np.testing.assert_allclose(np.asarray(accu), np.asarray(ref_accu),
                               rtol=1e-3, atol=1e-3)
    if gamma == 0.0:
        np.testing.assert_allclose(np.asarray(loss), np.asarray(ref_loss),
                                   rtol=1e-4, atol=1e-5)
    else:
        np.testing.assert_allclose(np.asarray(loss), np.asarray(ref_loss),
                                   rtol=1e-3, atol=1e-2)


if __name__ == "__main__":
    key = jax.random.PRNGKey(0)
    k1, k2, k3, k4 = jax.random.split(key, 4)

    B, F = 2, 32
    C, H, W = 4, 16, 16

    feat_real = jax.random.normal(k1, (B, F), dtype=jnp.float32)
    feat_pred = jax.random.normal(k2, (B, F), dtype=jnp.float32)
    imag_real = jax.random.uniform(k3, (B, C, H, W), dtype=jnp.float32)
    imag_pred = jax.random.uniform(k4, (B, C, H, W), dtype=jnp.float32)

    # 1) default gamma (single tile) and annealed gamma (same compiled kernel,
    #    gamma is a runtime scalar).
    _check(feat_real, feat_pred, imag_real, imag_pred, gamma=0.0)
    _check(feat_real, feat_pred, imag_real, imag_pred, gamma=0.3)

    # 2) bf16 inputs travel through HBM/VMEM in bf16 (no wrapper upcast).
    _check(feat_real.astype(jnp.bfloat16), feat_pred.astype(jnp.bfloat16),
           imag_real.astype(jnp.bfloat16), imag_pred.astype(jnp.bfloat16),
           gamma=0.3)

    # 3) multi-tile grid path (forced small tile -> 4 pipelined steps).
    k5, k6 = jax.random.split(k4)
    big_pred = jax.random.uniform(k5, (B, C, 32, 32), dtype=jnp.float32)
    _check(feat_real, feat_pred, None, big_pred, gamma=0.3, tile_rows=8)

    # 4) ragged size exercising the padding-correction path (M = 3*17*17).
    odd_pred = jax.random.uniform(k6, (B, 3, 17, 17), dtype=jnp.float32)
    _check(feat_real, feat_pred, None, odd_pred, gamma=0.3)

    print("KERNEL_OK")
</pallas_src>

<mosaic_0001>
module attributes {stable_mosaic.version = 11 : i64} {
  func.func @_tandem_kernel(%arg0: i32, %arg1: memref<1xf32, #tpu.memory_space<smem>>, %arg2: memref<2x32xf32, #tpu.memory_space<vmem>>, %arg3: memref<2x32xf32, #tpu.memory_space<vmem>>, %arg4: memref<2x8x128xf32, #tpu.memory_space<vmem>>, %arg5: memref<1x1xf32, #tpu.memory_space<smem>>, %arg6: memref<1x1xf32, #tpu.memory_space<smem>>, %arg7: memref<2x1x1xf32, #tpu.memory_space<vmem>>, %arg8: memref<2x1x1xf32, #tpu.memory_space<vmem>>, %arg9: memref<2x1x1xf32, #tpu.memory_space<vmem>>) attributes {dimension_semantics = [#tpu.dimension_semantics<arbitrary>], iteration_bounds = array<i64: 1>, scalar_prefetch = 0 : i64, scratch_operands = 3 : i64, tpu.core_type = #tpu.core_type<tc>, window_params = [{transform_indices = @transform_0, window_bounds = array<i64: 1>}, {pipeline_mode = #tpu.pipeline_mode<synchronous>, transform_indices = @transform_1, window_bounds = array<i64: 2, 32>}, {pipeline_mode = #tpu.pipeline_mode<synchronous>, transform_indices = @transform_2, window_bounds = array<i64: 2, 32>}, {transform_indices = @transform_3, window_bounds = array<i64: 2, 8, 128>}, {transform_indices = @transform_4, window_bounds = array<i64: 1, 1>}, {transform_indices = @transform_5, window_bounds = array<i64: 1, 1>}]} {
    %c0_i32 = arith.constant 0 : i32
    %0 = arith.cmpi eq, %arg0, %c0_i32 : i32
    %1 = arith.extui %0 : i1 to i32
    %c0_i32_0 = arith.constant 0 : i32
    %2 = arith.cmpi ne, %1, %c0_i32_0 : i32
    scf.if %2 {
      %cst_31 = arith.constant 0.000000e+00 : f32
      %38 = vector.broadcast %cst_31 : f32 to vector<2x1x1xf32>
      %c0_32 = arith.constant 0 : index
      %c0_33 = arith.constant 0 : index
      %c0_34 = arith.constant 0 : index
      %39 = vector.load %arg7[%c0_32, %c0_33, %c0_34] : memref<2x1x1xf32, #tpu.memory_space<vmem>>, vector<2x1x1xf32>
      tpu.vector_store %arg7[%c0_32, %c0_33, %c0_34], %38 {strides = array<i32>} : memref<2x1x1xf32, #tpu.memory_space<vmem>>, vector<2x1x1xf32>,
      %cst_35 = arith.constant 0.000000e+00 : f32
      %40 = vector.broadcast %cst_35 : f32 to vector<2x1x1xf32>
      %c0_36 = arith.constant 0 : index
      %c0_37 = arith.constant 0 : index
      %c0_38 = arith.constant 0 : index
      %41 = vector.load %arg8[%c0_36, %c0_37, %c0_38] : memref<2x1x1xf32, #tpu.memory_space<vmem>>, vector<2x1x1xf32>
      tpu.vector_store %arg8[%c0_36, %c0_37, %c0_38], %40 {strides = array<i32>} : memref<2x1x1xf32, #tpu.memory_space<vmem>>, vector<2x1x1xf32>,
      %cst_39 = arith.constant 0.000000e+00 : f32
      %42 = vector.broadcast %cst_39 : f32 to vector<2x1x1xf32>
      %c0_40 = arith.constant 0 : index
      %c0_41 = arith.constant 0 : index
      %c0_42 = arith.constant 0 : index
      %43 = vector.load %arg9[%c0_40, %c0_41, %c0_42] : memref<2x1x1xf32, #tpu.memory_space<vmem>>, vector<2x1x1xf32>
      tpu.vector_store %arg9[%c0_40, %c0_41, %c0_42], %42 {strides = array<i32>} : memref<2x1x1xf32, #tpu.memory_space<vmem>>, vector<2x1x1xf32>,
    } else {
    }
    %c0 = arith.constant 0 : index
    %c0_1 = arith.constant 0 : index
    %c0_2 = arith.constant 0 : index
    %3 = vector.load %arg4[%c0, %c0_1, %c0_2] : memref<2x8x128xf32, #tpu.memory_space<vmem>>, vector<2x8x128xf32>
    %cst = arith.constant 5.000000e-01 : f32
    %4 = vector.broadcast %cst : f32 to vector<2x8x128xf32>
    %5 = arith.subf %3, %4 : vector<2x8x128xf32>
    %6 = arith.mulf %5, %5 : vector<2x8x128xf32>
    %cst_3 = arith.constant 9.99999974E-6 : f32
    %7 = vector.broadcast %cst_3 : f32 to vector<2x8x128xf32>
    %8 = arith.addf %6, %7 : vector<2x8x128xf32>
    %9 = tpu.reciprocal %8 {approx = true} : vector<2x8x128xf32> -> vector<2x8x128xf32>
    %10 = arith.mulf %8, %9 : vector<2x8x128xf32>
    %cst_4 = arith.constant 2.000000e+00 : f32
    %11 = vector.broadcast %cst_4 : f32 to vector<2x8x128xf32>
    %12 = arith.subf %11, %10 : vector<2x8x128xf32>
    %13 = arith.mulf %9, %12 : vector<2x8x128xf32>
    %c0_5 = arith.constant 0 : index
    %c0_6 = arith.constant 0 : index
    %c0_7 = arith.constant 0 : index
    %14 = vector.load %arg7[%c0_5, %c0_6, %c0_7] : memref<2x1x1xf32, #tpu.memory_space<vmem>>, vector<2x1x1xf32>
    %cst_8 = arith.constant dense<0.000000e+00> : vector<2x8xf32>
    %15 = vector.multi_reduction <add>, %5, %cst_8 [2] : vector<2x8x128xf32> to vector<2x8xf32>
    %16 = vector.shape_cast %15 : vector<2x8xf32> to vector<2x8x1xf32>
    %cst_9 = arith.constant dense<0.000000e+00> : vector<2x1xf32>
    %17 = vector.multi_reduction <add>, %16, %cst_9 [1] : vector<2x8x1xf32> to vector<2x1xf32>
    %18 = vector.shape_cast %17 : vector<2x1xf32> to vector<2x1x1xf32>
    %19 = arith.addf %14, %18 : vector<2x1x1xf32>
    %c0_10 = arith.constant 0 : index
    %c0_11 = arith.constant 0 : index
    %c0_12 = arith.constant 0 : index
    %20 = vector.load %arg7[%c0_10, %c0_11, %c0_12] : memref<2x1x1xf32, #tpu.memory_space<vmem>>, vector<2x1x1xf32>
    tpu.vector_store %arg7[%c0_10, %c0_11, %c0_12], %19 {strides = array<i32>} : memref<2x1x1xf32, #tpu.memory_space<vmem>>, vector<2x1x1xf32>,
    %c0_13 = arith.constant 0 : index
    %c0_14 = arith.constant 0 : index
    %c0_15 = arith.constant 0 : index
    %21 = vector.load %arg8[%c0_13, %c0_14, %c0_15] : memref<2x1x1xf32, #tpu.memory_space<vmem>>, vector<2x1x1xf32>
    %cst_16 = arith.constant dense<0.000000e+00> : vector<2x8xf32>
    %22 = vector.multi_reduction <add>, %6, %cst_16 [2] : vector<2x8x128xf32> to vector<2x8xf32>
    %23 = vector.shape_cast %22 : vector<2x8xf32> to vector<2x8x1xf32>
    %cst_17 = arith.constant dense<0.000000e+00> : vector<2x1xf32>
    %24 = vector.multi_reduction <add>, %23, %cst_17 [1] : vector<2x8x1xf32> to vector<2x1xf32>
    %25 = vector.shape_cast %24 : vector<2x1xf32> to vector<2x1x1xf32>
    %26 = arith.addf %21, %25 : vector<2x1x1xf32>
    %c0_18 = arith.constant 0 : index
    %c0_19 = arith.constant 0 : index
    %c0_20 = arith.constant 0 : index
    %27 = vector.load %arg8[%c0_18, %c0_19, %c0_20] : memref<2x1x1xf32, #tpu.memory_space<vmem>>, vector<2x1x1xf32>
    tpu.vector_store %arg8[%c0_18, %c0_19, %c0_20], %26 {strides = array<i32>} : memref<2x1x1xf32, #tpu.memory_space<vmem>>, vector<2x1x1xf32>,
    %c0_21 = arith.constant 0 : index
    %c0_22 = arith.constant 0 : index
    %c0_23 = arith.constant 0 : index
    %28 = vector.load %arg9[%c0_21, %c0_22, %c0_23] : memref<2x1x1xf32, #tpu.memory_space<vmem>>, vector<2x1x1xf32>
    %cst_24 = arith.constant dense<0.000000e+00> : vector<2x8xf32>
    %29 = vector.multi_reduction <add>, %13, %cst_24 [2] : vector<2x8x128xf32> to vector<2x8xf32>
    %30 = vector.shape_cast %29 : vector<2x8xf32> to vector<2x8x1xf32>
    %cst_25 = arith.constant dense<0.000000e+00> : vector<2x1xf32>
    %31 = vector.multi_reduction <add>, %30, %cst_25 [1] : vector<2x8x1xf32> to vector<2x1xf32>
    %32 = vector.shape_cast %31 : vector<2x1xf32> to vector<2x1x1xf32>
    %33 = arith.addf %28, %32 : vector<2x1x1xf32>
    %c0_26 = arith.constant 0 : index
    %c0_27 = arith.constant 0 : index
    %c0_28 = arith.constant 0 : index
    %34 = vector.load %arg9[%c0_26, %c0_27, %c0_28] : memref<2x1x1xf32, #tpu.memory_space<vmem>>, vector<2x1x1xf32>
    tpu.vector_store %arg9[%c0_26, %c0_27, %c0_28], %33 {strides = array<i32>} : memref<2x1x1xf32, #tpu.memory_space<vmem>>, vector<2x1x1xf32>,
    %c0_i32_29 = arith.constant 0 : i32
    %35 = arith.cmpi eq, %arg0, %c0_i32_29 : i32
    %36 = arith.extui %35 : i1 to i32
    %c0_i32_30 = arith.constant 0 : i32
    %37 = arith.cmpi ne, %36, %c0_i32_30 : i32
    scf.if %37 {
      %c0_31 = arith.constant 0 : index
      %c0_32 = arith.constant 0 : index
      %c0_33 = arith.constant 0 : index
      %38 = vector.load %arg7[%c0_31, %c0_32, %c0_33] : memref<2x1x1xf32, #tpu.memory_space<vmem>>, vector<2x1x1xf32>
      %cst_34 = arith.constant 0.000000e+00 : f32
      %39 = vector.broadcast %cst_34 : f32 to vector<2x1x1xf32>
      %40 = arith.subf %38, %39 : vector<2x1x1xf32>
      %c0_35 = arith.constant 0 : index
      %c0_36 = arith.constant 0 : index
      %c0_37 = arith.constant 0 : index
      %41 = vector.load %arg8[%c0_35, %c0_36, %c0_37] : memref<2x1x1xf32, #tpu.memory_space<vmem>>, vector<2x1x1xf32>
      %cst_38 = arith.constant 0.000000e+00 : f32
      %42 = vector.broadcast %cst_38 : f32 to vector<2x1x1xf32>
      %43 = arith.subf %41, %42 : vector<2x1x1xf32>
      %c0_39 = arith.constant 0 : index
      %c0_40 = arith.constant 0 : index
      %c0_41 = arith.constant 0 : index
      %44 = vector.load %arg9[%c0_39, %c0_40, %c0_41] : memref<2x1x1xf32, #tpu.memory_space<vmem>>, vector<2x1x1xf32>
      %45 = vector.shape_cast %44 : vector<2x1x1xf32> to vector<1x2x1x1xf32>
      %cst_42 = arith.constant dense<0.000000e+00> : vector<1xf32>
      %46 = vector.multi_reduction <add>, %45, %cst_42 [1, 2, 3] : vector<1x2x1x1xf32> to vector<1xf32>
      %47 = vector.shape_cast %46 : vector<1xf32> to vector<1x1x1x1xf32>
      %48 = vector.extract %47[0, 0, 0, 0] : f32 from vector<1x1x1x1xf32>
      %cst_43 = arith.constant 0.000000e+00 : f32
      %49 = arith.subf %48, %cst_43 : f32
      %c0_44 = arith.constant 0 : index
      %c0_45 = arith.constant 0 : index
      %50 = vector.load %arg3[%c0_44, %c0_45] : memref<2x32xf32, #tpu.memory_space<vmem>>, vector<2x32xf32>
      %c0_46 = arith.constant 0 : index
      %c0_47 = arith.constant 0 : index
      %51 = vector.load %arg2[%c0_46, %c0_47] : memref<2x32xf32, #tpu.memory_space<vmem>>, vector<2x32xf32>
      %52 = arith.subf %50, %51 : vector<2x32xf32>
      %53 = arith.mulf %52, %52 : vector<2x32xf32>
      %54 = vector.shape_cast %53 : vector<2x32xf32> to vector<1x2x32xf32>
      %cst_48 = arith.constant dense<0.000000e+00> : vector<1xf32>
      %55 = vector.multi_reduction <add>, %54, %cst_48 [1, 2] : vector<1x2x32xf32> to vector<1xf32>
      %56 = vector.shape_cast %55 : vector<1xf32> to vector<1x1x1xf32>
      %57 = vector.extract %56[0, 0, 0] : f32 from vector<1x1x1xf32>
      %cst_49 = arith.constant 1.562500e-02 : f32
      %58 = arith.mulf %57, %cst_49 : f32
      %cst_50 = arith.constant 4.8828125E-4 : f32
      %59 = arith.mulf %49, %cst_50 : f32
      %60 = arith.mulf %40, %40 : vector<2x1x1xf32>
      %cst_51 = arith.constant 9.765625E-4 : f32
      %61 = vector.broadcast %cst_51 : f32 to vector<2x1x1xf32>
      %62 = arith.mulf %60, %61 : vector<2x1x1xf32>
      %63 = arith.subf %43, %62 : vector<2x1x1xf32>
      %cst_52 = arith.constant 9.77517105E-4 : f32
      %64 = vector.broadcast %cst_52 : f32 to vector<2x1x1xf32>
      %65 = arith.mulf %63, %64 : vector<2x1x1xf32>
      %cst_53 = arith.constant 9.99999974E-6 : f32
      %66 = vector.broadcast %cst_53 : f32 to vector<2x1x1xf32>
      %67 = arith.addf %65, %66 : vector<2x1x1xf32>
      %cst_54 = arith.constant 1.000000e+00 : f32
      %68 = vector.broadcast %cst_54 : f32 to vector<2x1x1xf32>
      %69 = arith.divf %68, %67 : vector<2x1x1xf32>
      %70 = vector.shape_cast %69 : vector<2x1x1xf32> to vector<1x2x1x1xf32>
      %cst_55 = arith.constant dense<0.000000e+00> : vector<1xf32>
      %71 = vector.multi_reduction <add>, %70, %cst_55 [1, 2, 3] : vector<1x2x1x1xf32> to vector<1xf32>
      %72 = vector.shape_cast %71 : vector<1xf32> to vector<1x1x1x1xf32>
      %73 = vector.extract %72[0, 0, 0, 0] : f32 from vector<1x1x1x1xf32>
      %cst_56 = arith.constant 5.000000e-01 : f32
      %74 = arith.mulf %73, %cst_56 : f32
      %c0_57 = arith.constant 0 : index
      %75 = memref.load %arg1[%c0_57] : memref<1xf32, #tpu.memory_space<smem>>
      %cst_58 = arith.constant 2.000000e+00 : f32
      %76 = arith.mulf %cst_58, %59 : f32
      %cst_59 = arith.constant 0.00999999977 : f32
      %77 = arith.mulf %cst_59, %74 : f32
      %78 = arith.addf %76, %77 : f32
      %cst_60 = arith.constant 1.000000e+00 : f32
      %79 = arith.subf %cst_60, %75 : f32
      %80 = arith.mulf %79, %58 : f32
      %81 = arith.mulf %75, %78 : f32
      %82 = arith.addf %80, %81 : f32
      %c0_61 = arith.constant 0 : index
      %c0_62 = arith.constant 0 : index
      %83 = memref.load %arg5[%c0_61, %c0_62] : memref<1x1xf32, #tpu.memory_space<smem>>
      memref.store %82, %arg5[%c0_61, %c0_62] : memref<1x1xf32, #tpu.memory_space<smem>>
      %c0_63 = arith.constant 0 : index
      %c0_64 = arith.constant 0 : index
      %84 = memref.load %arg6[%c0_63, %c0_64] : memref<1x1xf32, #tpu.memory_space<smem>>
      memref.store %59, %arg6[%c0_63, %c0_64] : memref<1x1xf32, #tpu.memory_space<smem>>
    } else {
    }
    return
  }
  func.func @transform_0(%arg0: i32) -> i32 {
    %c0_i32 = arith.constant 0 : i32
    %c0_i32_0 = arith.constant 0 : i32
    return %c0_i32 : i32
  }
  func.func @transform_1(%arg0: i32) -> (i32, i32) {
    %c0_i32 = arith.constant 0 : i32
    %c0_i32_0 = arith.constant 0 : i32
    %c0_i32_1 = arith.constant 0 : i32
    return %c0_i32, %c0_i32_0 : i32, i32
  }
  func.func @transform_2(%arg0: i32) -> (i32, i32) {
    %c0_i32 = arith.constant 0 : i32
    %c0_i32_0 = arith.constant 0 : i32
    %c0_i32_1 = arith.constant 0 : i32
    return %c0_i32, %c0_i32_0 : i32, i32
  }
  func.func @transform_3(%arg0: i32) -> (i32, i32, i32) {
    %c0_i32 = arith.constant 0 : i32
    %c0_i32_0 = arith.constant 0 : i32
    %c0_i32_1 = arith.constant 0 : i32
    return %c0_i32, %arg0, %c0_i32_0 : i32, i32, i32
  }
  func.func @transform_4(%arg0: i32) -> (i32, i32) {
    %c0_i32 = arith.constant 0 : i32
    %c0_i32_0 = arith.constant 0 : i32
    %c0_i32_1 = arith.constant 0 : i32
    return %c0_i32, %c0_i32_0 : i32, i32
  }
  func.func @transform_5(%arg0: i32) -> (i32, i32) {
    %c0_i32 = arith.constant 0 : i32
    %c0_i32_0 = arith.constant 0 : i32
    %c0_i32_1 = arith.constant 0 : i32
    return %c0_i32, %c0_i32_0 : i32, i32
  }
}

</mosaic_0001>

<llo_original>
// kernel: tpu_custom_call.1
$region0: #{tpu_custom_call.1}
  #allocation0 [shape = 'u32[]', space=smem, size = 0x4, offset = 0x4, fixed_abs, tag = 'smem constant byte address 0x4 - core index']
  #allocation1 [shape = 'u32[144,128]{1,0:T(1,128)}', space=vmem, size = 0x12000, scoped, tag = 'internal scratch']
  #allocation2 [shape = 'f32[2,1,1]{2,1,0:T(1,128)}', space=vmem, size = 0x400, scoped, tag = 'scratch operand']
  #allocation3 [shape = 'f32[2,1,1]{2,1,0:T(1,128)}', space=vmem, size = 0x400, scoped, tag = 'scratch operand']
  #allocation4 [shape = 'f32[2,1,1]{2,1,0:T(1,128)}', space=vmem, size = 0x400, scoped, tag = 'scratch operand']
  #allocation5 [shape = 'f32[1]{0:T(128)S(6)}', space=smem, size = 0x200, scoped, tag = 'scoped memory for tpu_custom_call.1']
  %s0 = inlined_call_operand.<no memory space> [shape: f32[1], index: 0, kind: input, shape index: {}]
  %s1 = inlined_call_operand.vmem [shape: f32[2,32], index: 1, kind: input, shape index: {}]
  %s2 = inlined_call_operand.vmem [shape: f32[2,32], index: 2, kind: input, shape index: {}]
  %s3 = inlined_call_operand.hbm [shape: f32[2,8,128], index: 3, kind: input, shape index: {}]
  %s4 = inlined_call_operand.hbm [shape: f32[1,1], index: 4, kind: output, shape index: {0}]
  %s5 = inlined_call_operand.hbm [shape: f32[1,1], index: 5, kind: output, shape index: {1}]
  %6 = xla_tuple %s4, %s5
  %s7 = sld [smem:[#allocation0]]
  $region46: #{tpu_custom_call.1} parent=0
    _
  %s9 = ssub.s32 1, %s7
  %s10 = scalar_select 0, %s9, %s7
  %11 = sst [smem:[#allocation5]] %s0
  $region1: #{tpu_custom_call.1} parent=0
    #allocation6 [shape = 'u8[8192]{0}', space=vmem, size = 0x2000, scoped, tag = 'input window, operand 3, single buffered']
    #allocation7 [shape = 's32[1]{0}', space=sflag, size = 0x4, scoped, tag = 'scoped memory for tpu_custom_call.1']
    #allocation8 [shape = 's32[1]{0}', space=sflag, size = 0x4, scoped, tag = 'scoped memory for tpu_custom_call.1']
    #allocation9 [shape = 'u8[512]{0}', space=smem, size = 0x200, scoped, tag = 'output window, operand 0, single buffered']
    #allocation10 [shape = 'u8[512]{0}', space=smem, size = 0x200, scoped, tag = 'output window, operand 1, single buffered']
    #allocation11 [shape = 's32[1]{0}', space=sflag, size = 0x4, scoped, tag = 'scoped memory for tpu_custom_call.1']
    %12 = vsyncpa [#allocation7], 0
    %13 = vsyncpa [#allocation8], 0
    %14 = vsyncpa [#allocation11], 0
    // Predicated region
    $region2: #{tpu_custom_call.1} parent=1 // pred_check
      _
    $region3: #{tpu_custom_call.1} parent=1 // pred_check_branch
      %16 = sbr.rel (0) target = $region5
    $region4: #{tpu_custom_call.1} parent=1 // pred_region
      _
    $region5: #{tpu_custom_call.1} parent=1 // pred_fallthru
      _
    // Predicated region
    $region6: #{tpu_custom_call.1} parent=1 // pred_check
      _
    $region7: #{tpu_custom_call.1} parent=1 // pred_check_branch
      %18 = sbr.rel (0) target = $region9
    $region8: #{tpu_custom_call.1} parent=1 // pred_region
      _
    $region9: #{tpu_custom_call.1} parent=1 // pred_fallthru
      _
    // Predicated region
    $region10: #{tpu_custom_call.1} parent=1 // pred_check
      _
    $region11: #{tpu_custom_call.1} parent=1 // pred_check_branch
      %20 = sbr.rel (0) target = $region13
    $region12: #{tpu_custom_call.1} parent=1 // pred_region
      _
    $region13: #{tpu_custom_call.1} parent=1 // pred_fallthru
      _
    // Predicated region
    $region14: #{tpu_custom_call.1} parent=1 // pred_check
      _
    $region15: #{tpu_custom_call.1} parent=1 // pred_check_branch
      %22 = sbr.rel (0) target = $region17
    $region16: #{tpu_custom_call.1} parent=1 // pred_region
      %s24 = ssub.s32 256, 256
      %25 = vsyncadd [#allocation7], %s24
      %s26 = sshll.u32 [#allocation6], 4
      %s27 = int_to_ptr.vmem [resolvable:$true] %s26
      %32 = dma.hbm_to_vmem [thread:$0]  %s3, 256, %s27, [#allocation7], 128, 128, 8
    $region17: #{tpu_custom_call.1} parent=1 // pred_fallthru
      _
    // Predicated region
    $region18: #{tpu_custom_call.1} parent=1 // pred_check
      _
    $region19: #{tpu_custom_call.1} parent=1 // pred_check_branch
      %34 = sbr.rel (0) target = $region21
    $region20: #{tpu_custom_call.1} parent=1 // pred_region
      %35 = dma.done [#allocation7], 256
    $region21: #{tpu_custom_call.1} parent=1 // pred_fallthru
      _
    %p36 = scmp.eq.s32.totalorder 0, 0
    // Predicated region
    $region22: #{tpu_custom_call.1} parent=1 // pred_check
      %p37 = pneg %p36
    $region23: #{tpu_custom_call.1} parent=1 // pred_check_branch
      %39 = sbr.rel (%p37) target = $region25
    $region24: #{tpu_custom_call.1} parent=1 // pred_region
      %vm40 = vcmask 0
      %41 = vst.msk [vmem:[#allocation2] sm:$0x1] %vm40, 0.0
      %42 = vst.msk [vmem:[#allocation2 + $0x1] sm:$0x1] %vm40, 0.0
      %43 = vst.msk [vmem:[#allocation3] sm:$0x1] %vm40, 0.0
      %44 = vst.msk [vmem:[#allocation3 + $0x1] sm:$0x1] %vm40, 0.0
      %45 = vst.msk [vmem:[#allocation4] sm:$0x1] %vm40, 0.0
      %46 = vst.msk [vmem:[#allocation4 + $0x1] sm:$0x1] %vm40, 0.0
    $region25: #{tpu_custom_call.1} parent=1 // pred_fallthru
      _
    %v47 = vld [vmem:[#allocation6] sm:$0xff]
    %v48 = vld [vmem:[#allocation6 + $0x8] sm:$0xff]
    %v49 = vsub.f32 %v47, 0.5
    %v50 = vsub.f32 %v48, 0.5
    %v51 = vmul.f32 %v49, %v49
    %v52 = vmul.f32 %v50, %v50
    %v53 = vadd.f32 %v51, 1e-05
    %v54 = vadd.f32 %v52, 1e-05
    %v55 = vrcp.pop %v53
    %v56 = vrcp.pop %v54
    %v57 = vmul.f32 %v53, %v55
    %v58 = vmul.f32 %v54, %v56
    %v59 = vsub.f32 2.0, %v57
    %v60 = vsub.f32 2.0, %v58
    %v61 = vmul.f32 %v55, %v59
    %v62 = vmul.f32 %v56, %v60
    %v63 = vld [vmem:[#allocation2] sm:$0x1]
    %v64 = vld [vmem:[#allocation2 + $0x1] sm:$0x1]
    %65 = vadd.xlane.f32.xlu0 %v49
    %v66 = vpop.xlane.xlu0 %65
    %67 = vadd.xlane.f32.xlu0 %v50
    %v68 = vpop.xlane.xlu0 %67
    %v69 = vrot.slane %v66, 4
    %v70 = vadd.f32 %v66, %v69
    %v71 = vrot.slane %v70, 2
    %v72 = vadd.f32 %v70, %v71
    %v73 = vrot.slane %v72, 1
    %v74 = vadd.f32 %v72, %v73
    %v75 = vrot.slane %v68, 4
    %v76 = vadd.f32 %v68, %v75
    %v77 = vrot.slane %v76, 2
    %v78 = vadd.f32 %v76, %v77
    %v79 = vrot.slane %v78, 1
    %v80 = vadd.f32 %v78, %v79
    %v81 = vadd.f32 %v63, %v74
    %v82 = vadd.f32 %v64, %v80
    %vm83 = vcmask 0
    %84 = vst.msk [vmem:[#allocation2] sm:$0x1] %vm83, %v81
    %85 = vst.msk [vmem:[#allocation2 + $0x1] sm:$0x1] %vm83, %v82
    %v86 = vld [vmem:[#allocation3] sm:$0x1]
    %v87 = vld [vmem:[#allocation3 + $0x1] sm:$0x1]
    %88 = vadd.xlane.f32.xlu0 %v51
    %v89 = vpop.xlane.xlu0 %88
    %90 = vadd.xlane.f32.xlu0 %v52
    %v91 = vpop.xlane.xlu0 %90
    %v92 = vrot.slane %v89, 4
    %v93 = vadd.f32 %v89, %v92
    %v94 = vrot.slane %v93, 2
    %v95 = vadd.f32 %v93, %v94
    %v96 = vrot.slane %v95, 1
    %v97 = vadd.f32 %v95, %v96
    %v98 = vrot.slane %v91, 4
    %v99 = vadd.f32 %v91, %v98
    %v100 = vrot.slane %v99, 2
    %v101 = vadd.f32 %v99, %v100
    %v102 = vrot.slane %v101, 1
    %v103 = vadd.f32 %v101, %v102
    %v104 = vadd.f32 %v86, %v97
    %v105 = vadd.f32 %v87, %v103
    %106 = vst.msk [vmem:[#allocation3] sm:$0x1] %vm83, %v104
    %107 = vst.msk [vmem:[#allocation3 + $0x1] sm:$0x1] %vm83, %v105
    %v108 = vld [vmem:[#allocation4] sm:$0x1]
    %v109 = vld [vmem:[#allocation4 + $0x1] sm:$0x1]
    %110 = vadd.xlane.f32.xlu0 %v61
    %v111 = vpop.xlane.xlu0 %110
    %112 = vadd.xlane.f32.xlu0 %v62
    %v113 = vpop.xlane.xlu0 %112
    %v114 = vrot.slane %v111, 4
    %v115 = vadd.f32 %v111, %v114
    %v116 = vrot.slane %v115, 2
    %v117 = vadd.f32 %v115, %v116
    %v118 = vrot.slane %v117, 1
    %v119 = vadd.f32 %v117, %v118
    %v120 = vrot.slane %v113, 4
    %v121 = vadd.f32 %v113, %v120
    %v122 = vrot.slane %v121, 2
    %v123 = vadd.f32 %v121, %v122
    %v124 = vrot.slane %v123, 1
    %v125 = vadd.f32 %v123, %v124
    %v126 = vadd.f32 %v108, %v119
    %v127 = vadd.f32 %v109, %v125
    %128 = vst.msk [vmem:[#allocation4] sm:$0x1] %vm83, %v126
    %129 = vst.msk [vmem:[#allocation4 + $0x1] sm:$0x1] %vm83, %v127
    // Predicated region
    $region26: #{tpu_custom_call.1} parent=1 // pred_check
      %p130 = pneg %p36
    $region27: #{tpu_custom_call.1} parent=1 // pred_check_branch
      %132 = sbr.rel (%p130) target = $region29
    $region28: #{tpu_custom_call.1} parent=1 // pred_region
      %v133 = vld [vmem:[#allocation2] sm:$0x1]
      %v134 = vld [vmem:[#allocation2 + $0x1] sm:$0x1]
      %v135 = vld [vmem:[#allocation3] sm:$0x1]
      %v136 = vld [vmem:[#allocation3 + $0x1] sm:$0x1]
      %v137 = vld [vmem:[#allocation4] sm:$0x1]
      %v138 = vld [vmem:[#allocation4 + $0x1] sm:$0x1]
      %v139 = vsel %vm83, %v137, 0.0
      %v140 = vsel %vm83, %v138, 0.0
      %v141 = vadd.f32 %v139, %v140
      %142 = vadd.xlane.f32.xlu0 %v141
      %v143 = vpop.xlane.xlu0 %142
      %v144 = vrot.slane %v143, 4
      %v145 = vadd.f32 %v143, %v144
      %v146 = vrot.slane %v145, 2
      %v147 = vadd.f32 %v145, %v146
      %v148 = vrot.slane %v147, 1
      %v149 = vadd.f32 %v147, %v148
      %s150 = vtos %v149
      %v151 = vld [vmem:[%s2] sm:$0x3]
      %v152 = vld [vmem:[%s1] sm:$0x3]
      %v153 = vsub.f32 %v151, %v152
      %v154 = vmul.f32 %v153, %v153
      %vm155 = vcmask 254976
      %v156 = vsel %vm155, %v154, 0.0
      %157 = vadd.xlane.f32.xlu0 %v156
      %v158 = vpop.xlane.xlu0 %157
      %v159 = vrot.slane %v158, 4
      %v160 = vadd.f32 %v158, %v159
      %v161 = vrot.slane %v160, 2
      %v162 = vadd.f32 %v160, %v161
      %v163 = vrot.slane %v162, 1
      %v164 = vadd.f32 %v162, %v163
      %s165 = vtos %v164
      %s166 = smul.f32 %s165, 0.015625
      %s167 = smul.f32 %s150, 0.00048828125
      %v168 = vmul.f32 %v133, %v133
      %v169 = vmul.f32 %v134, %v134
      %v170 = vmul.f32 %v168, 0.0009765625
      %v171 = vmul.f32 %v169, 0.0009765625
      %v172 = vsub.f32 %v135, %v170
      %v173 = vsub.f32 %v136, %v171
      %v174 = vmul.f32 %v172, 0.0009775171
      %v175 = vmul.f32 %v173, 0.0009775171
      %v176 = vadd.f32 %v174, 1e-05
      %v177 = vadd.f32 %v175, 1e-05
      %v178 = vrcp.pop %v176
      %v179 = vmul.f32 1.0, %v178
      %v180 = vrcp.pop %v177
      %v181 = vmul.f32 1.0, %v180
      %v182 = vsel %vm83, %v179, 0.0
      %v183 = vsel %vm83, %v181, 0.0
      %v184 = vadd.f32 %v182, %v183
      %185 = vadd.xlane.f32.xlu0 %v184
      %v186 = vpop.xlane.xlu0 %185
      %v187 = vrot.slane %v186, 4
      %v188 = vadd.f32 %v186, %v187
      %v189 = vrot.slane %v188, 2
      %v190 = vadd.f32 %v188, %v189
      %v191 = vrot.slane %v190, 1
      %v192 = vadd.f32 %v190, %v191
      %s193 = vtos %v192
      %s194 = smul.f32 %s193, 0.5
      %s195 = sld [smem:[#allocation5]]
      %s196 = smul.f32 %s167, 2.0
      %s197 = smul.f32 %s194, 0.01
      %s198 = sadd.f32 %s196, %s197
      %s199 = ssub.f32 1.0, %s195
      %s200 = smul.f32 %s199, %s166
      %s201 = smul.f32 %s195, %s198
      %s202 = sadd.f32 %s200, %s201
      %s203 = scalar_lea.smem [#allocation9], 0
      %204 = sst [smem:[%s203]] %s202
      %s205 = scalar_lea.smem [#allocation10], 0
      %206 = sst [smem:[%s205]] %s167
    $region29: #{tpu_custom_call.1} parent=1 // pred_fallthru
      _
    // Predicated region
    $region30: #{tpu_custom_call.1} parent=1 // pred_check
      _
    $region31: #{tpu_custom_call.1} parent=1 // pred_check_branch
      %208 = sbr.rel (0) target = $region33
    $region32: #{tpu_custom_call.1} parent=1 // pred_region
      %s210 = ssub.s32 16, 16
      %211 = vsyncadd [#allocation8], %s210
      %214 = dma.smem_to_hbm [#allocation9], 16, %s4, [#allocation8]
    $region33: #{tpu_custom_call.1} parent=1 // pred_fallthru
      _
    // Predicated region
    $region34: #{tpu_custom_call.1} parent=1 // pred_check
      _
    $region35: #{tpu_custom_call.1} parent=1 // pred_check_branch
      %216 = sbr.rel (0) target = $region37
    $region36: #{tpu_custom_call.1} parent=1 // pred_region
      %s218 = ssub.s32 16, 16
      %219 = vsyncadd [#allocation11], %s218
      %222 = dma.smem_to_hbm [#allocation10], 16, %s5, [#allocation11]
    $region37: #{tpu_custom_call.1} parent=1 // pred_fallthru
      _
    // Predicated region
    $region38: #{tpu_custom_call.1} parent=1 // pred_check
      _
    $region39: #{tpu_custom_call.1} parent=1 // pred_check_branch
      %224 = sbr.rel (0) target = $region41
    $region40: #{tpu_custom_call.1} parent=1 // pred_region
      %225 = dma.done [#allocation8], 16
    $region41: #{tpu_custom_call.1} parent=1 // pred_fallthru
      _
    // Predicated region
    $region42: #{tpu_custom_call.1} parent=1 // pred_check
      _
    $region43: #{tpu_custom_call.1} parent=1 // pred_check_branch
      %227 = sbr.rel (0) target = $region45
    $region44: #{tpu_custom_call.1} parent=1 // pred_region
      %228 = dma.done [#allocation11], 16
    $region45: #{tpu_custom_call.1} parent=1 // pred_fallthru
      _
    %229 = sfence
    %230 = vsyncpa [#allocation7], 1
    %231 = vsyncpa [#allocation8], 1
    %232 = vsyncpa [#allocation11], 1

</llo_original>
